<compile_context>
chip_gen: v6e
topology: v6e:2x2x1
jax: 0.10.0
libtpu: 0.0.40
codegen_flags: <defaults>
</compile_context>

<pallas_src>
import functools

import jax
import jax.numpy as jnp
from jax.experimental import pallas as pl
from jax.experimental.pallas import tpu as pltpu


def _round_up(x, m):
    return ((x + m - 1) // m) * m


def _nonlinear_bin_kernel(x_ref, w1_ref, b1_ref, w2_ref, b2_ref, o_ref):
    """One (tm, in_nc) row tile -> one (tm, num_bins) output tile."""
    in_nc = x_ref.shape[1]
    num_bins = o_ref.shape[1]

    x = x_ref[...].astype(jnp.float32)            # (tm, in_nc)
    w1 = w1_ref[...]                              # (in_nc, nc_pad) f32

    # ---- Layer 1 on the VPU -------------------------------------------------
    # K = in_nc is tiny; unrolled rank-1 broadcast multiply-adds in f32 keep
    # this work off the MXU (whose push count for K=3 would equal the dominant
    # second matmul's).  Bias is folded into the first update.
    h = x[:, 0:1] * w1[0:1, :] + b1_ref[...]      # (tm, nc_pad)
    for k in range(1, in_nc):
        h = h + x[:, k:k + 1] * w1[k:k + 1, :]

    # LeakyReLU (PyTorch default slope 0.01): max(h, 0.01*h), f32 on the VPU.
    h = jnp.maximum(h, 0.01 * h)

    # ---- Layer 2 on the MXU ---------------------------------------------------
    # bf16 operands, f32 accumulation, lane-dense (nc_pad x nb_pad) weights.
    o = jnp.dot(h.astype(w2_ref.dtype), w2_ref[...],
                preferred_element_type=jnp.float32)
    o = o + b2_ref[...]

    # Store only the meaningful num_bins lanes (masked vst).  This cuts HBM
    # writeback ~5x vs a padded 128-lane store and removes the post-kernel
    # slice pass entirely.
    o_ref[...] = o[:, :num_bins].astype(o_ref.dtype)


def prepare_params(w1, b1, w2, b2, *, w2_dtype=jnp.bfloat16):
    """Pad / cast parameters ONCE (hoisted out of the per-call hot path).

    w1: (in_nc, nc), b1: (nc,), w2: (nc, num_bins), b2: (num_bins,)
    (weights already transposed to (in, out) relative to nn.Linear.weight).

    Zero padding is numerically exact: padded hidden columns get weight 0 and
    bias 0 -> h = 0 -> LeakyReLU(0) = 0, and padded output columns are never
    stored (the kernel writes only the first num_bins lanes).
    """
    in_nc, nc = w1.shape
    num_bins = w2.shape[1]
    nc_pad = _round_up(nc, 128)
    nb_pad = _round_up(num_bins, 128)

    w1p = jnp.pad(w1, ((0, 0), (0, nc_pad - nc))).astype(jnp.float32)
    b1p = jnp.pad(b1.reshape(1, nc), ((0, 0), (0, nc_pad - nc))).astype(jnp.float32)
    w2p = jnp.pad(w2, ((0, nc_pad - nc), (0, nb_pad - num_bins))).astype(w2_dtype)
    b2p = jnp.pad(b2.reshape(1, num_bins),
                  ((0, 0), (0, nb_pad - num_bins))).astype(jnp.float32)
    return w1p, b1p, w2p, b2p, num_bins


@functools.partial(jax.jit, static_argnames=("num_bins", "tm"))
def nonlinear_bin(inp, w1p, b1p, w2p, b2p, *, num_bins, tm=1024):
    """inp: (..., in_nc) -> (..., num_bins), matching NonLinearBin.forward."""
    in_nc = inp.shape[-1]
    nc_pad = w1p.shape[1]
    nb_pad = w2p.shape[1]

    lead_shape = inp.shape[:-1]
    x = inp.reshape(-1, in_nc)
    m = x.shape[0]

    # Row tile: multiple of 256 (fills MXU rows, bf16 sublane tiling), clamped
    # so (a) tiny inputs don't allocate an oversized tile and (b) when there is
    # enough work the grid has >= 2 row tiles so v7x's two TensorCores both get
    # work via the "parallel" axis (v5e/v6e are single-TC, overhead is ~0.35us
    # per extra step, negligible).
    tm_cap = _round_up(-(-m // 2), 256) if m > 256 else 256
    tm_eff = max(256, min(tm, tm_cap))
    grid_m = pl.cdiv(m, tm_eff)

    out_dtype = inp.dtype
    in_bytes = jnp.dtype(inp.dtype).itemsize
    out_bytes = jnp.dtype(out_dtype).itemsize
    w2_bytes = jnp.dtype(w2p.dtype).itemsize

    # VMEM budget (lane/sublane padding accounted for):
    #   - x tile is lane-padded (tm, in_nc) -> (tm, 128), double-buffered
    #   - out tile is lane-padded (tm, num_bins) -> (tm, 128), double-buffered
    #   - resident weights / biases (sublane-padded), x2 for buffering
    #   - compiler-managed temporaries: f32 h + its bf16 copy (tm * nc_pad * 6B)
    vmem_est = (
        2 * tm_eff * 128 * 4
        + 2 * tm_eff * _round_up(num_bins, 128) * out_bytes
        + 2 * _round_up(in_nc, 8) * nc_pad * 4
        + 2 * nc_pad * nb_pad * w2_bytes
        + 2 * 8 * (nc_pad + nb_pad) * 4
        + tm_eff * nc_pad * (4 + w2_bytes)
    )
    vmem_limit = int(min(max(vmem_est + vmem_est // 2 + (4 << 20), 16 << 20),
                         64 << 20))

    cost = pl.CostEstimate(
        flops=2 * m * (in_nc * nc_pad + nc_pad * nb_pad),
        transcendentals=0,
        bytes_accessed=(m * in_nc * in_bytes
                        + (in_nc * nc_pad + nc_pad * nb_pad) * w2_bytes
                        + (nc_pad + nb_pad) * 4
                        + m * num_bins * out_bytes),
    )

    out = pl.pallas_call(
        _nonlinear_bin_kernel,
        out_shape=jax.ShapeDtypeStruct((m, num_bins), out_dtype),
        grid_spec=pltpu.PrefetchScalarGridSpec(
            num_scalar_prefetch=0,
            grid=(grid_m,),
            in_specs=[
                pl.BlockSpec((tm_eff, in_nc), lambda i: (i, 0)),    # x row tile
                pl.BlockSpec((in_nc, nc_pad), lambda i: (0, 0)),    # W1 (resident, f32)
                pl.BlockSpec((1, nc_pad), lambda i: (0, 0)),        # b1
                pl.BlockSpec((nc_pad, nb_pad), lambda i: (0, 0)),   # W2 (resident, bf16)
                pl.BlockSpec((1, nb_pad), lambda i: (0, 0)),        # b2
            ],
            out_specs=pl.BlockSpec((tm_eff, num_bins), lambda i: (i, 0)),
        ),
        compiler_params=pltpu.CompilerParams(
            dimension_semantics=("parallel",),
            vmem_limit_bytes=vmem_limit,
        ),
        cost_estimate=cost,
    )(x, w1p, b1p, w2p, b2p)

    return out.reshape(*lead_shape, num_bins)


if __name__ == "__main__":
    # Shapes consistent with NonLinearBin(in_nc=3, nc=1600, num_bins=25),
    # with a scaled-down hidden width for a quick self-test.
    in_nc, nc, num_bins = 3, 256, 25
    key = jax.random.PRNGKey(0)
    k_x, k1, k2, k3, k4 = jax.random.split(key, 5)

    # Any leading dims are allowed by nn.Linear: (batch, seq, in_nc).
    inp = jax.random.normal(k_x, (2, 8, in_nc), jnp.float32)

    # PyTorch nn.Linear default init: U[-1/sqrt(fan_in), +1/sqrt(fan_in)],
    # weights stored already transposed to (in, out) for the kernel.
    bound1 = 1.0 / (in_nc ** 0.5)
    bound2 = 1.0 / (nc ** 0.5)
    w1 = jax.random.uniform(k1, (in_nc, nc), jnp.float32, -bound1, bound1)
    b1 = jax.random.uniform(k2, (nc,), jnp.float32, -bound1, bound1)
    w2 = jax.random.uniform(k3, (nc, num_bins), jnp.float32, -bound2, bound2)
    b2 = jax.random.uniform(k4, (num_bins,), jnp.float32, -bound2, bound2)

    # Pad / cast weights once (hoisted out of the hot path).
    w1p, b1p, w2p, b2p, nb = prepare_params(w1, b1, w2, b2)

    out = nonlinear_bin(inp, w1p, b1p, w2p, b2p, num_bins=nb)
    out = jax.block_until_ready(out)
    assert out.shape == (2, 8, num_bins), out.shape

    # Pure-f32 reference of the PyTorch module semantics.  Tolerance is relaxed
    # because the second matmul feeds the MXU bf16 operands (f32 accumulation);
    # layer 1 + LeakyReLU are exact f32.
    h_ref = inp @ w1 + b1
    h_ref = jnp.where(h_ref > 0, h_ref, 0.01 * h_ref)
    ref = h_ref @ w2 + b2
    max_err = float(jnp.max(jnp.abs(out - ref)))
    assert jnp.allclose(out, ref, atol=2e-2, rtol=2e-2), max_err

    print("KERNEL_OK")
</pallas_src>

<mosaic_0001>
module attributes {stable_mosaic.version = 11 : i64} {
  func.func @_nonlinear_bin_kernel(%arg0: i32, %arg1: memref<256x3xf32, #tpu.memory_space<vmem>>, %arg2: memref<3x256xf32, #tpu.memory_space<vmem>>, %arg3: memref<1x256xf32, #tpu.memory_space<vmem>>, %arg4: memref<256x128xbf16, #tpu.memory_space<vmem>>, %arg5: memref<1x128xf32, #tpu.memory_space<vmem>>, %arg6: memref<256x25xf32, #tpu.memory_space<vmem>>) attributes {dimension_semantics = [#tpu.dimension_semantics<parallel>], iteration_bounds = array<i64: 1>, scalar_prefetch = 0 : i64, scratch_operands = 0 : i64, tpu.core_type = #tpu.core_type<tc>, window_params = [{transform_indices = @transform_0, window_bounds = array<i64: 256, 3>}, {pipeline_mode = #tpu.pipeline_mode<synchronous>, transform_indices = @transform_1, window_bounds = array<i64: 3, 256>}, {pipeline_mode = #tpu.pipeline_mode<synchronous>, transform_indices = @transform_2, window_bounds = array<i64: 1, 256>}, {pipeline_mode = #tpu.pipeline_mode<synchronous>, transform_indices = @transform_3, window_bounds = array<i64: 256, 128>}, {pipeline_mode = #tpu.pipeline_mode<synchronous>, transform_indices = @transform_4, window_bounds = array<i64: 1, 128>}, {transform_indices = @transform_5, window_bounds = array<i64: 256, 25>}]} {
    %c0 = arith.constant 0 : index
    %c0_0 = arith.constant 0 : index
    %0 = vector.load %arg1[%c0, %c0_0] : memref<256x3xf32, #tpu.memory_space<vmem>>, vector<256x3xf32>
    %c0_1 = arith.constant 0 : index
    %c0_2 = arith.constant 0 : index
    %1 = vector.load %arg2[%c0_1, %c0_2] : memref<3x256xf32, #tpu.memory_space<vmem>>, vector<3x256xf32>
    %2 = vector.extract_strided_slice %0 {offsets = [0, 0], sizes = [256, 1], strides = [1, 1]} : vector<256x3xf32> to vector<256x1xf32>
    %3 = vector.extract_strided_slice %1 {offsets = [0, 0], sizes = [1, 256], strides = [1, 1]} : vector<3x256xf32> to vector<1x256xf32>
    %4 = vector.broadcast %2 : vector<256x1xf32> to vector<256x256xf32>
    %5 = vector.broadcast %3 : vector<1x256xf32> to vector<256x256xf32>
    %6 = arith.mulf %4, %5 : vector<256x256xf32>
    %c0_3 = arith.constant 0 : index
    %c0_4 = arith.constant 0 : index
    %7 = vector.load %arg3[%c0_3, %c0_4] : memref<1x256xf32, #tpu.memory_space<vmem>>, vector<1x256xf32>
    %8 = vector.broadcast %7 : vector<1x256xf32> to vector<256x256xf32>
    %9 = arith.addf %6, %8 : vector<256x256xf32>
    %10 = vector.extract_strided_slice %0 {offsets = [0, 1], sizes = [256, 1], strides = [1, 1]} : vector<256x3xf32> to vector<256x1xf32>
    %11 = vector.extract_strided_slice %1 {offsets = [1, 0], sizes = [1, 256], strides = [1, 1]} : vector<3x256xf32> to vector<1x256xf32>
    %12 = vector.broadcast %10 : vector<256x1xf32> to vector<256x256xf32>
    %13 = vector.broadcast %11 : vector<1x256xf32> to vector<256x256xf32>
    %14 = arith.mulf %12, %13 : vector<256x256xf32>
    %15 = arith.addf %9, %14 : vector<256x256xf32>
    %16 = vector.extract_strided_slice %0 {offsets = [0, 2], sizes = [256, 1], strides = [1, 1]} : vector<256x3xf32> to vector<256x1xf32>
    %17 = vector.extract_strided_slice %1 {offsets = [2, 0], sizes = [1, 256], strides = [1, 1]} : vector<3x256xf32> to vector<1x256xf32>
    %18 = vector.broadcast %16 : vector<256x1xf32> to vector<256x256xf32>
    %19 = vector.broadcast %17 : vector<1x256xf32> to vector<256x256xf32>
    %20 = arith.mulf %18, %19 : vector<256x256xf32>
    %21 = arith.addf %15, %20 : vector<256x256xf32>
    %cst = arith.constant 0.00999999977 : f32
    %22 = vector.broadcast %cst : f32 to vector<256x256xf32>
    %23 = arith.mulf %22, %21 : vector<256x256xf32>
    %24 = arith.maximumf %21, %23 : vector<256x256xf32>
    %25 = arith.truncf %24 : vector<256x256xf32> to vector<256x256xbf16>
    %c0_5 = arith.constant 0 : index
    %c0_6 = arith.constant 0 : index
    %26 = vector.load %arg4[%c0_5, %c0_6] : memref<256x128xbf16, #tpu.memory_space<vmem>>, vector<256x128xbf16>
    %cst_7 = arith.constant dense<0.000000e+00> : vector<256x128xf32>
    %27 = tpu.matmul %25, %26, %cst_7 {dimension_numbers = #tpu.dot_dimension_numbers<[1], [0], [0], [1], [0, 0, 1, 1], [], []>} : vector<256x256xbf16>, vector<256x128xbf16>, vector<256x128xf32> -> vector<256x128xf32>
    %c0_8 = arith.constant 0 : index
    %c0_9 = arith.constant 0 : index
    %28 = vector.load %arg5[%c0_8, %c0_9] : memref<1x128xf32, #tpu.memory_space<vmem>>, vector<1x128xf32>
    %29 = vector.broadcast %28 : vector<1x128xf32> to vector<256x128xf32>
    %30 = arith.addf %27, %29 : vector<256x128xf32>
    %31 = vector.extract_strided_slice %30 {offsets = [0, 0], sizes = [256, 25], strides = [1, 1]} : vector<256x128xf32> to vector<256x25xf32>
    %c0_10 = arith.constant 0 : index
    %c0_11 = arith.constant 0 : index
    %32 = vector.load %arg6[%c0_10, %c0_11] : memref<256x25xf32, #tpu.memory_space<vmem>>, vector<256x25xf32>
    tpu.vector_store %arg6[%c0_10, %c0_11], %31 {strides = array<i32>} : memref<256x25xf32, #tpu.memory_space<vmem>>, vector<256x25xf32>,
    return
  }
  func.func @transform_0(%arg0: i32) -> (i32, i32) {
    %c0_i32 = arith.constant 0 : i32
    %c0_i32_0 = arith.constant 0 : i32
    return %arg0, %c0_i32 : i32, i32
  }
  func.func @transform_1(%arg0: i32) -> (i32, i32) {
    %c0_i32 = arith.constant 0 : i32
    %c0_i32_0 = arith.constant 0 : i32
    %c0_i32_1 = arith.constant 0 : i32
    return %c0_i32, %c0_i32_0 : i32, i32
  }
  func.func @transform_2(%arg0: i32) -> (i32, i32) {
    %c0_i32 = arith.constant 0 : i32
    %c0_i32_0 = arith.constant 0 : i32
    %c0_i32_1 = arith.constant 0 : i32
    return %c0_i32, %c0_i32_0 : i32, i32
  }
  func.func @transform_3(%arg0: i32) -> (i32, i32) {
    %c0_i32 = arith.constant 0 : i32
    %c0_i32_0 = arith.constant 0 : i32
    %c0_i32_1 = arith.constant 0 : i32
    return %c0_i32, %c0_i32_0 : i32, i32
  }
  func.func @transform_4(%arg0: i32) -> (i32, i32) {
    %c0_i32 = arith.constant 0 : i32
    %c0_i32_0 = arith.constant 0 : i32
    %c0_i32_1 = arith.constant 0 : i32
    return %c0_i32, %c0_i32_0 : i32, i32
  }
  func.func @transform_5(%arg0: i32) -> (i32, i32) {
    %c0_i32 = arith.constant 0 : i32
    %c0_i32_0 = arith.constant 0 : i32
    return %arg0, %c0_i32 : i32, i32
  }
}

</mosaic_0001>

<llo_original>
// kernel: nonlinear_bin.1
$region0: #{nonlinear_bin.1}
  #allocation0 [shape = 'u32[]', space=smem, size = 0x4, offset = 0x4, fixed_abs, tag = 'smem constant byte address 0x4 - core index']
  #allocation1 [shape = 'u32[144,128]{1,0:T(1,128)}', space=vmem, size = 0x12000, scoped, tag = 'internal scratch']
  %s0 = inlined_call_operand.vmem [shape: f32[16,3], index: 0, kind: input, shape index: {}]
  %s1 = inlined_call_operand.vmem [shape: f32[3,256], index: 1, kind: input, shape index: {}]
  %s2 = inlined_call_operand.vmem [shape: f32[1,256], index: 2, kind: input, shape index: {}]
  %s3 = inlined_call_operand.hbm [shape: bf16[256,128], index: 3, kind: input, shape index: {}]
  %s4 = inlined_call_operand.vmem [shape: f32[1,128], index: 4, kind: input, shape index: {}]
  %s5 = inlined_call_operand.hbm [shape: f32[16,25], index: 5, kind: output, shape index: {}]
  %s6 = sld [smem:[#allocation0]]
  $region34: #{nonlinear_bin.1} parent=0
    _
  %s8 = ssub.s32 1, %s6
  %s9 = scalar_select 0, %s8, %s6
  $region1: #{nonlinear_bin.1} parent=0
    #allocation2 [shape = 'u8[65536]{0}', space=vmem, size = 0x10000, scoped, tag = 'input window, operand 3, single buffered']
    #allocation3 [shape = 's32[1]{0}', space=sflag, size = 0x4, scoped, tag = 'scoped memory for nonlinear_bin.1']
    #allocation4 [shape = 's32[1]{0}', space=sflag, size = 0x4, scoped, tag = 'scoped memory for nonlinear_bin.1']
    #allocation5 [shape = 'u8[131072]{0}', space=vmem, size = 0x20000, scoped, tag = 'output window, operand 0, single buffered']
    %10 = vsyncpa [#allocation3], 0
    %11 = vsyncpa [#allocation4], 0
    // Predicated region
    $region2: #{nonlinear_bin.1} parent=1 // pred_check
      _
    $region3: #{nonlinear_bin.1} parent=1 // pred_check_branch
      %13 = sbr.rel (0) target = $region5
    $region4: #{nonlinear_bin.1} parent=1 // pred_region
      _
    $region5: #{nonlinear_bin.1} parent=1 // pred_fallthru
      _
    // Predicated region
    $region6: #{nonlinear_bin.1} parent=1 // pred_check
      _
    $region7: #{nonlinear_bin.1} parent=1 // pred_check_branch
      %15 = sbr.rel (0) target = $region9
    $region8: #{nonlinear_bin.1} parent=1 // pred_region
      _
    $region9: #{nonlinear_bin.1} parent=1 // pred_fallthru
      _
    // Predicated region
    $region10: #{nonlinear_bin.1} parent=1 // pred_check
      _
    $region11: #{nonlinear_bin.1} parent=1 // pred_check_branch
      %17 = sbr.rel (0) target = $region13
    $region12: #{nonlinear_bin.1} parent=1 // pred_region
      _
    $region13: #{nonlinear_bin.1} parent=1 // pred_fallthru
      _
    // Predicated region
    $region14: #{nonlinear_bin.1} parent=1 // pred_check
      _
    $region15: #{nonlinear_bin.1} parent=1 // pred_check_branch
      %19 = sbr.rel (0) target = $region17
    $region16: #{nonlinear_bin.1} parent=1 // pred_region
      %s21 = ssub.s32 2048, 2048
      %22 = vsyncadd [#allocation3], %s21
      %s23 = sshll.u32 [#allocation2], 4
      %s24 = int_to_ptr.vmem [resolvable:$true] %s23
      %29 = dma.hbm_to_vmem [thread:$0]  %s3, 2048, %s24, [#allocation3], 64, 64, 4
    $region17: #{nonlinear_bin.1} parent=1 // pred_fallthru
      _
    // Predicated region
    $region18: #{nonlinear_bin.1} parent=1 // pred_check
      _
    $region19: #{nonlinear_bin.1} parent=1 // pred_check_branch
      %31 = sbr.rel (0) target = $region21
    $region20: #{nonlinear_bin.1} parent=1 // pred_region
      _
    $region21: #{nonlinear_bin.1} parent=1 // pred_fallthru
      _
    // Predicated region
    $region22: #{nonlinear_bin.1} parent=1 // pred_check
      _
    $region23: #{nonlinear_bin.1} parent=1 // pred_check_branch
      %33 = sbr.rel (0) target = $region25
    $region24: #{nonlinear_bin.1} parent=1 // pred_region
      %34 = dma.done [#allocation3], 2048
    $region25: #{nonlinear_bin.1} parent=1 // pred_fallthru
      _
    %v36 = vld [vmem:[%s0] sm:$0xff]
    %v37 = vld [vmem:[%s0 + $0x8] sm:$0xff]
    %v38 = vld [vmem:[%s0 + $0x10] sm:$0xff]
    %v39 = vld [vmem:[%s0 + $0x18] sm:$0xff]
    %v40 = vld [vmem:[%s0 + $0x20] sm:$0xff]
    %v41 = vld [vmem:[%s0 + $0x28] sm:$0xff]
    %v42 = vld [vmem:[%s0 + $0x30] sm:$0xff]
    %v43 = vld [vmem:[%s0 + $0x38] sm:$0xff]
    %v44 = vld [vmem:[%s0 + $0x40] sm:$0xff]
    %v45 = vld [vmem:[%s0 + $0x48] sm:$0xff]
    %v46 = vld [vmem:[%s0 + $0x50] sm:$0xff]
    %v47 = vld [vmem:[%s0 + $0x58] sm:$0xff]
    %v48 = vld [vmem:[%s0 + $0x60] sm:$0xff]
    %v49 = vld [vmem:[%s0 + $0x68] sm:$0xff]
    %v50 = vld [vmem:[%s0 + $0x70] sm:$0xff]
    %v51 = vld [vmem:[%s0 + $0x78] sm:$0xff]
    %v52 = vld [vmem:[%s0 + $0x80] sm:$0xff]
    %v53 = vld [vmem:[%s0 + $0x88] sm:$0xff]
    %v54 = vld [vmem:[%s0 + $0x90] sm:$0xff]
    %v55 = vld [vmem:[%s0 + $0x98] sm:$0xff]
    %v56 = vld [vmem:[%s0 + $0xa0] sm:$0xff]
    %v57 = vld [vmem:[%s0 + $0xa8] sm:$0xff]
    %v58 = vld [vmem:[%s0 + $0xb0] sm:$0xff]
    %v59 = vld [vmem:[%s0 + $0xb8] sm:$0xff]
    %v60 = vld [vmem:[%s0 + $0xc0] sm:$0xff]
    %v61 = vld [vmem:[%s0 + $0xc8] sm:$0xff]
    %v62 = vld [vmem:[%s0 + $0xd0] sm:$0xff]
    %v63 = vld [vmem:[%s0 + $0xd8] sm:$0xff]
    %v64 = vld [vmem:[%s0 + $0xe0] sm:$0xff]
    %v65 = vld [vmem:[%s0 + $0xe8] sm:$0xff]
    %v66 = vld [vmem:[%s0 + $0xf0] sm:$0xff]
    %v67 = vld [vmem:[%s0 + $0xf8] sm:$0xff]
    %v68 = vld [vmem:[%s1] sm:$0x77]
    %70 = vset.pattern.permute.xlu0 0
    %71 = vperm.xlu0 %70, %v36
    %v72 = vpop.permute.xlu0 %71
    %75 = vset.pattern.permute.xlu0 0
    %76 = vperm.xlu0 %75, %v37
    %v77 = vpop.permute.xlu0 %76
    %80 = vset.pattern.permute.xlu0 0
    %81 = vperm.xlu0 %80, %v38
    %v82 = vpop.permute.xlu0 %81
    %85 = vset.pattern.permute.xlu0 0
    %86 = vperm.xlu0 %85, %v39
    %v87 = vpop.permute.xlu0 %86
    %90 = vset.pattern.permute.xlu0 0
    %91 = vperm.xlu0 %90, %v40
    %v92 = vpop.permute.xlu0 %91
    %95 = vset.pattern.permute.xlu0 0
    %96 = vperm.xlu0 %95, %v41
    %v97 = vpop.permute.xlu0 %96
    %100 = vset.pattern.permute.xlu0 0
    %101 = vperm.xlu0 %100, %v42
    %v102 = vpop.permute.xlu0 %101
    %105 = vset.pattern.permute.xlu0 0
    %106 = vperm.xlu0 %105, %v43
    %v107 = vpop.permute.xlu0 %106
    %110 = vset.pattern.permute.xlu0 0
    %111 = vperm.xlu0 %110, %v44
    %v112 = vpop.permute.xlu0 %111
    %115 = vset.pattern.permute.xlu0 0
    %116 = vperm.xlu0 %115, %v45
    %v117 = vpop.permute.xlu0 %116
    %120 = vset.pattern.permute.xlu0 0
    %121 = vperm.xlu0 %120, %v46
    %v122 = vpop.permute.xlu0 %121
    %125 = vset.pattern.permute.xlu0 0
    %126 = vperm.xlu0 %125, %v47
    %v127 = vpop.permute.xlu0 %126
    %130 = vset.pattern.permute.xlu0 0
    %131 = vperm.xlu0 %130, %v48
    %v132 = vpop.permute.xlu0 %131
    %135 = vset.pattern.permute.xlu0 0
    %136 = vperm.xlu0 %135, %v49
    %v137 = vpop.permute.xlu0 %136
    %140 = vset.pattern.permute.xlu0 0
    %141 = vperm.xlu0 %140, %v50
    %v142 = vpop.permute.xlu0 %141
    %145 = vset.pattern.permute.xlu0 0
    %146 = vperm.xlu0 %145, %v51
    %v147 = vpop.permute.xlu0 %146
    %150 = vset.pattern.permute.xlu0 0
    %151 = vperm.xlu0 %150, %v52
    %v152 = vpop.permute.xlu0 %151
    %155 = vset.pattern.permute.xlu0 0
    %156 = vperm.xlu0 %155, %v53
    %v157 = vpop.permute.xlu0 %156
    %160 = vset.pattern.permute.xlu0 0
    %161 = vperm.xlu0 %160, %v54
    %v162 = vpop.permute.xlu0 %161
    %165 = vset.pattern.permute.xlu0 0
    %166 = vperm.xlu0 %165, %v55
    %v167 = vpop.permute.xlu0 %166
    %170 = vset.pattern.permute.xlu0 0
    %171 = vperm.xlu0 %170, %v56
    %v172 = vpop.permute.xlu0 %171
    %175 = vset.pattern.permute.xlu0 0
    %176 = vperm.xlu0 %175, %v57
    %v177 = vpop.permute.xlu0 %176
    %180 = vset.pattern.permute.xlu0 0
    %181 = vperm.xlu0 %180, %v58
    %v182 = vpop.permute.xlu0 %181
    %185 = vset.pattern.permute.xlu0 0
    %186 = vperm.xlu0 %185, %v59
    %v187 = vpop.permute.xlu0 %186
    %190 = vset.pattern.permute.xlu0 0
    %191 = vperm.xlu0 %190, %v60
    %v192 = vpop.permute.xlu0 %191
    %195 = vset.pattern.permute.xlu0 0
    %196 = vperm.xlu0 %195, %v61
    %v197 = vpop.permute.xlu0 %196
    %200 = vset.pattern.permute.xlu0 0
    %201 = vperm.xlu0 %200, %v62
    %v202 = vpop.permute.xlu0 %201
    %205 = vset.pattern.permute.xlu0 0
    %206 = vperm.xlu0 %205, %v63
    %v207 = vpop.permute.xlu0 %206
    %210 = vset.pattern.permute.xlu0 0
    %211 = vperm.xlu0 %210, %v64
    %v212 = vpop.permute.xlu0 %211
    %215 = vset.pattern.permute.xlu0 0
    %216 = vperm.xlu0 %215, %v65
    %v217 = vpop.permute.xlu0 %216
    %220 = vset.pattern.permute.xlu0 0
    %221 = vperm.xlu0 %220, %v66
    %v222 = vpop.permute.xlu0 %221
    %225 = vset.pattern.permute.xlu0 0
    %226 = vperm.xlu0 %225, %v67
    %v227 = vpop.permute.xlu0 %226
    %v230 = vlaneseq
    %v231 = vshrl.u32 %v230, 7
    %v232 = vsub.s32 0, %v231
    %v233 = vrot.slane %v68, %v232
    %v234 = vlaneseq
    %v235 = vshrl.u32 %v234, 7
    %v236 = vsub.s32 4, %v235
    %v237 = vrot.slane %v68, %v236
    %v240 = vlaneseq
    %v241 = vshrl.u32 %v240, 7
    %v242 = vsub.s32 0, %v241
    %v243 = vrot.slane %v233, %v242
    %v244 = vlaneseq
    %v245 = vshrl.u32 %v244, 7
    %v246 = vsub.s32 0, %v245
    %v247 = vrot.slane %v237, %v246
    %v248 = vmul.f32 %v72, %v243
    %v249 = vmul.f32 %v72, %v247
    %v250 = vmul.f32 %v77, %v243
    %v251 = vmul.f32 %v77, %v247
    %v252 = vmul.f32 %v82, %v243
    %v253 = vmul.f32 %v82, %v247
    %v254 = vmul.f32 %v87, %v243
    %v255 = vmul.f32 %v87, %v247
    %v256 = vmul.f32 %v92, %v243
    %v257 = vmul.f32 %v92, %v247
    %v258 = vmul.f32 %v97, %v243
    %v259 = vmul.f32 %v97, %v247
    %v260 = vmul.f32 %v102, %v243
    %v261 = vmul.f32 %v102, %v247
    %v262 = vmul.f32 %v107, %v243
    %v263 = vmul.f32 %v107, %v247
    %v264 = vmul.f32 %v112, %v243
    %v265 = vmul.f32 %v112, %v247
    %v266 = vmul.f32 %v117, %v243
    %v267 = vmul.f32 %v117, %v247
    %v268 = vmul.f32 %v122, %v243
    %v269 = vmul.f32 %v122, %v247
    %v270 = vmul.f32 %v127, %v243
    %v271 = vmul.f32 %v127, %v247
    %v272 = vmul.f32 %v132, %v243
    %v273 = vmul.f32 %v132, %v247
    %v274 = vmul.f32 %v137, %v243
    %v275 = vmul.f32 %v137, %v247
    %v276 = vmul.f32 %v142, %v243
    %v277 = vmul.f32 %v142, %v247
    %v278 = vmul.f32 %v147, %v243
    %v279 = vmul.f32 %v147, %v247
    %v280 = vmul.f32 %v152, %v243
    %v281 = vmul.f32 %v152, %v247
    %v282 = vmul.f32 %v157, %v243
    %v283 = vmul.f32 %v157, %v247
    %v284 = vmul.f32 %v162, %v243
    %v285 = vmul.f32 %v162, %v247
    %v286 = vmul.f32 %v167, %v243
    %v287 = vmul.f32 %v167, %v247
    %v288 = vmul.f32 %v172, %v243
    %v289 = vmul.f32 %v172, %v247
    %v290 = vmul.f32 %v177, %v243
    %v291 = vmul.f32 %v177, %v247
    %v292 = vmul.f32 %v182, %v243
    %v293 = vmul.f32 %v182, %v247
    %v294 = vmul.f32 %v187, %v243
    %v295 = vmul.f32 %v187, %v247
    %v296 = vmul.f32 %v192, %v243
    %v297 = vmul.f32 %v192, %v247
    %v298 = vmul.f32 %v197, %v243
    %v299 = vmul.f32 %v197, %v247
    %v300 = vmul.f32 %v202, %v243
    %v301 = vmul.f32 %v202, %v247
    %v302 = vmul.f32 %v207, %v243
    %v303 = vmul.f32 %v207, %v247
    %v304 = vmul.f32 %v212, %v243
    %v305 = vmul.f32 %v212, %v247
    %v306 = vmul.f32 %v217, %v243
    %v307 = vmul.f32 %v217, %v247
    %v308 = vmul.f32 %v222, %v243
    %v309 = vmul.f32 %v222, %v247
    %v310 = vmul.f32 %v227, %v243
    %v311 = vmul.f32 %v227, %v247
    %v312 = vld [vmem:[%s2] sm:$0x3]
    %v314 = vlaneseq
    %v315 = vshrl.u32 %v314, 7
    %v316 = vsub.s32 0, %v315
    %v317 = vrot.slane %v312, %v316
    %v318 = vlaneseq
    %v319 = vshrl.u32 %v318, 7
    %v320 = vsub.s32 1, %v319
    %v321 = vrot.slane %v312, %v320
    %v324 = vadd.f32 %v248, %v317
    %v325 = vadd.f32 %v249, %v321
    %v326 = vadd.f32 %v250, %v317
    %v327 = vadd.f32 %v251, %v321
    %v328 = vadd.f32 %v252, %v317
    %v329 = vadd.f32 %v253, %v321
    %v330 = vadd.f32 %v254, %v317
    %v331 = vadd.f32 %v255, %v321
    %v332 = vadd.f32 %v256, %v317
    %v333 = vadd.f32 %v257, %v321
    %v334 = vadd.f32 %v258, %v317
    %v335 = vadd.f32 %v259, %v321
    %v336 = vadd.f32 %v260, %v317
    %v337 = vadd.f32 %v261, %v321
    %v338 = vadd.f32 %v262, %v317
    %v339 = vadd.f32 %v263, %v321
    %v340 = vadd.f32 %v264, %v317
    %v341 = vadd.f32 %v265, %v321
    %v342 = vadd.f32 %v266, %v317
    %v343 = vadd.f32 %v267, %v321
    %v344 = vadd.f32 %v268, %v317
    %v345 = vadd.f32 %v269, %v321
    %v346 = vadd.f32 %v270, %v317
    %v347 = vadd.f32 %v271, %v321
    %v348 = vadd.f32 %v272, %v317
    %v349 = vadd.f32 %v273, %v321
    %v350 = vadd.f32 %v274, %v317
    %v351 = vadd.f32 %v275, %v321
    %v352 = vadd.f32 %v276, %v317
    %v353 = vadd.f32 %v277, %v321
    %v354 = vadd.f32 %v278, %v317
    %v355 = vadd.f32 %v279, %v321
    %v356 = vadd.f32 %v280, %v317
    %v357 = vadd.f32 %v281, %v321
    %v358 = vadd.f32 %v282, %v317
    %v359 = vadd.f32 %v283, %v321
    %v360 = vadd.f32 %v284, %v317
    %v361 = vadd.f32 %v285, %v321
    %v362 = vadd.f32 %v286, %v317
    %v363 = vadd.f32 %v287, %v321
    %v364 = vadd.f32 %v288, %v317
    %v365 = vadd.f32 %v289, %v321
    %v366 = vadd.f32 %v290, %v317
    %v367 = vadd.f32 %v291, %v321
    %v368 = vadd.f32 %v292, %v317
    %v369 = vadd.f32 %v293, %v321
    %v370 = vadd.f32 %v294, %v317
    %v371 = vadd.f32 %v295, %v321
    %v372 = vadd.f32 %v296, %v317
    %v373 = vadd.f32 %v297, %v321
    %v374 = vadd.f32 %v298, %v317
    %v375 = vadd.f32 %v299, %v321
    %v376 = vadd.f32 %v300, %v317
    %v377 = vadd.f32 %v301, %v321
    %v378 = vadd.f32 %v302, %v317
    %v379 = vadd.f32 %v303, %v321
    %v380 = vadd.f32 %v304, %v317
    %v381 = vadd.f32 %v305, %v321
    %v382 = vadd.f32 %v306, %v317
    %v383 = vadd.f32 %v307, %v321
    %v384 = vadd.f32 %v308, %v317
    %v385 = vadd.f32 %v309, %v321
    %v386 = vadd.f32 %v310, %v317
    %v387 = vadd.f32 %v311, %v321
    %388 = vset.pattern.permute.xlu0 1
    %389 = vperm.xlu0 %388, %v36
    %v390 = vpop.permute.xlu0 %389
    %392 = vset.pattern.permute.xlu0 1
    %393 = vperm.xlu0 %392, %v37
    %v394 = vpop.permute.xlu0 %393
    %396 = vset.pattern.permute.xlu0 1
    %397 = vperm.xlu0 %396, %v38
    %v398 = vpop.permute.xlu0 %397
    %400 = vset.pattern.permute.xlu0 1
    %401 = vperm.xlu0 %400, %v39
    %v402 = vpop.permute.xlu0 %401
    %404 = vset.pattern.permute.xlu0 1
    %405 = vperm.xlu0 %404, %v40
    %v406 = vpop.permute.xlu0 %405
    %408 = vset.pattern.permute.xlu0 1
    %409 = vperm.xlu0 %408, %v41
    %v410 = vpop.permute.xlu0 %409
    %412 = vset.pattern.permute.xlu0 1
    %413 = vperm.xlu0 %412, %v42
    %v414 = vpop.permute.xlu0 %413
    %416 = vset.pattern.permute.xlu0 1
    %417 = vperm.xlu0 %416, %v43
    %v418 = vpop.permute.xlu0 %417
    %420 = vset.pattern.permute.xlu0 1
    %421 = vperm.xlu0 %420, %v44
    %v422 = vpop.permute.xlu0 %421
    %424 = vset.pattern.permute.xlu0 1
    %425 = vperm.xlu0 %424, %v45
    %v426 = vpop.permute.xlu0 %425
    %428 = vset.pattern.permute.xlu0 1
    %429 = vperm.xlu0 %428, %v46
    %v430 = vpop.permute.xlu0 %429
    %432 = vset.pattern.permute.xlu0 1
    %433 = vperm.xlu0 %432, %v47
    %v434 = vpop.permute.xlu0 %433
    %436 = vset.pattern.permute.xlu0 1
    %437 = vperm.xlu0 %436, %v48
    %v438 = vpop.permute.xlu0 %437
    %440 = vset.pattern.permute.xlu0 1
    %441 = vperm.xlu0 %440, %v49
    %v442 = vpop.permute.xlu0 %441
    %444 = vset.pattern.permute.xlu0 1
    %445 = vperm.xlu0 %444, %v50
    %v446 = vpop.permute.xlu0 %445
    %448 = vset.pattern.permute.xlu0 1
    %449 = vperm.xlu0 %448, %v51
    %v450 = vpop.permute.xlu0 %449
    %452 = vset.pattern.permute.xlu0 1
    %453 = vperm.xlu0 %452, %v52
    %v454 = vpop.permute.xlu0 %453
    %456 = vset.pattern.permute.xlu0 1
    %457 = vperm.xlu0 %456, %v53
    %v458 = vpop.permute.xlu0 %457
    %460 = vset.pattern.permute.xlu0 1
    %461 = vperm.xlu0 %460, %v54
    %v462 = vpop.permute.xlu0 %461
    %464 = vset.pattern.permute.xlu0 1
    %465 = vperm.xlu0 %464, %v55
    %v466 = vpop.permute.xlu0 %465
    %468 = vset.pattern.permute.xlu0 1
    %469 = vperm.xlu0 %468, %v56
    %v470 = vpop.permute.xlu0 %469
    %472 = vset.pattern.permute.xlu0 1
    %473 = vperm.xlu0 %472, %v57
    %v474 = vpop.permute.xlu0 %473
    %476 = vset.pattern.permute.xlu0 1
    %477 = vperm.xlu0 %476, %v58
    %v478 = vpop.permute.xlu0 %477
    %480 = vset.pattern.permute.xlu0 1
    %481 = vperm.xlu0 %480, %v59
    %v482 = vpop.permute.xlu0 %481
    %484 = vset.pattern.permute.xlu0 1
    %485 = vperm.xlu0 %484, %v60
    %v486 = vpop.permute.xlu0 %485
    %488 = vset.pattern.permute.xlu0 1
    %489 = vperm.xlu0 %488, %v61
    %v490 = vpop.permute.xlu0 %489
    %492 = vset.pattern.permute.xlu0 1
    %493 = vperm.xlu0 %492, %v62
    %v494 = vpop.permute.xlu0 %493
    %496 = vset.pattern.permute.xlu0 1
    %497 = vperm.xlu0 %496, %v63
    %v498 = vpop.permute.xlu0 %497
    %500 = vset.pattern.permute.xlu0 1
    %501 = vperm.xlu0 %500, %v64
    %v502 = vpop.permute.xlu0 %501
    %504 = vset.pattern.permute.xlu0 1
    %505 = vperm.xlu0 %504, %v65
    %v506 = vpop.permute.xlu0 %505
    %508 = vset.pattern.permute.xlu0 1
    %509 = vperm.xlu0 %508, %v66
    %v510 = vpop.permute.xlu0 %509
    %512 = vset.pattern.permute.xlu0 1
    %513 = vperm.xlu0 %512, %v67
    %v514 = vpop.permute.xlu0 %513
    %v516 = vlaneseq
    %v517 = vshrl.u32 %v516, 7
    %v518 = vsub.s32 1, %v517
    %v519 = vrot.slane %v68, %v518
    %v520 = vlaneseq
    %v521 = vshrl.u32 %v520, 7
    %v522 = vsub.s32 5, %v521
    %v523 = vrot.slane %v68, %v522
    %v526 = vlaneseq
    %v527 = vshrl.u32 %v526, 7
    %v528 = vsub.s32 1, %v527
    %v529 = vrot.slane %v519, %v528
    %v530 = vlaneseq
    %v531 = vshrl.u32 %v530, 7
    %v532 = vsub.s32 1, %v531
    %v533 = vrot.slane %v523, %v532
    %v534 = vmul.f32 %v390, %v529
    %v535 = vmul.f32 %v390, %v533
    %v536 = vmul.f32 %v394, %v529
    %v537 = vmul.f32 %v394, %v533
    %v538 = vmul.f32 %v398, %v529
    %v539 = vmul.f32 %v398, %v533
    %v540 = vmul.f32 %v402, %v529
    %v541 = vmul.f32 %v402, %v533
    %v542 = vmul.f32 %v406, %v529
    %v543 = vmul.f32 %v406, %v533
    %v544 = vmul.f32 %v410, %v529
    %v545 = vmul.f32 %v410, %v533
    %v546 = vmul.f32 %v414, %v529
    %v547 = vmul.f32 %v414, %v533
    %v548 = vmul.f32 %v418, %v529
    %v549 = vmul.f32 %v418, %v533
    %v550 = vmul.f32 %v422, %v529
    %v551 = vmul.f32 %v422, %v533
    %v552 = vmul.f32 %v426, %v529
    %v553 = vmul.f32 %v426, %v533
    %v554 = vmul.f32 %v430, %v529
    %v555 = vmul.f32 %v430, %v533
    %v556 = vmul.f32 %v434, %v529
    %v557 = vmul.f32 %v434, %v533
    %v558 = vmul.f32 %v438, %v529
    %v559 = vmul.f32 %v438, %v533
    %v560 = vmul.f32 %v442, %v529
    %v561 = vmul.f32 %v442, %v533
    %v562 = vmul.f32 %v446, %v529
    %v563 = vmul.f32 %v446, %v533
    %v564 = vmul.f32 %v450, %v529
    %v565 = vmul.f32 %v450, %v533
    %v566 = vmul.f32 %v454, %v529
    %v567 = vmul.f32 %v454, %v533
    %v568 = vmul.f32 %v458, %v529
    %v569 = vmul.f32 %v458, %v533
    %v570 = vmul.f32 %v462, %v529
    %v571 = vmul.f32 %v462, %v533
    %v572 = vmul.f32 %v466, %v529
    %v573 = vmul.f32 %v466, %v533
    %v574 = vmul.f32 %v470, %v529
    %v575 = vmul.f32 %v470, %v533
    %v576 = vmul.f32 %v474, %v529
    %v577 = vmul.f32 %v474, %v533
    %v578 = vmul.f32 %v478, %v529
    %v579 = vmul.f32 %v478, %v533
    %v580 = vmul.f32 %v482, %v529
    %v581 = vmul.f32 %v482, %v533
    %v582 = vmul.f32 %v486, %v529
    %v583 = vmul.f32 %v486, %v533
    %v584 = vmul.f32 %v490, %v529
    %v585 = vmul.f32 %v490, %v533
    %v586 = vmul.f32 %v494, %v529
    %v587 = vmul.f32 %v494, %v533
    %v588 = vmul.f32 %v498, %v529
    %v589 = vmul.f32 %v498, %v533
    %v590 = vmul.f32 %v502, %v529
    %v591 = vmul.f32 %v502, %v533
    %v592 = vmul.f32 %v506, %v529
    %v593 = vmul.f32 %v506, %v533
    %v594 = vmul.f32 %v510, %v529
    %v595 = vmul.f32 %v510, %v533
    %v596 = vmul.f32 %v514, %v529
    %v597 = vmul.f32 %v514, %v533
    %v598 = vadd.f32 %v324, %v534
    %v599 = vadd.f32 %v325, %v535
    %v600 = vadd.f32 %v326, %v536
    %v601 = vadd.f32 %v327, %v537
    %v602 = vadd.f32 %v328, %v538
    %v603 = vadd.f32 %v329, %v539
    %v604 = vadd.f32 %v330, %v540
    %v605 = vadd.f32 %v331, %v541
    %v606 = vadd.f32 %v332, %v542
    %v607 = vadd.f32 %v333, %v543
    %v608 = vadd.f32 %v334, %v544
    %v609 = vadd.f32 %v335, %v545
    %v610 = vadd.f32 %v336, %v546
    %v611 = vadd.f32 %v337, %v547
    %v612 = vadd.f32 %v338, %v548
    %v613 = vadd.f32 %v339, %v549
    %v614 = vadd.f32 %v340, %v550
    %v615 = vadd.f32 %v341, %v551
    %v616 = vadd.f32 %v342, %v552
    %v617 = vadd.f32 %v343, %v553
    %v618 = vadd.f32 %v344, %v554
    %v619 = vadd.f32 %v345, %v555
    %v620 = vadd.f32 %v346, %v556
    %v621 = vadd.f32 %v347, %v557
    %v622 = vadd.f32 %v348, %v558
    %v623 = vadd.f32 %v349, %v559
    %v624 = vadd.f32 %v350, %v560
    %v625 = vadd.f32 %v351, %v561
    %v626 = vadd.f32 %v352, %v562
    %v627 = vadd.f32 %v353, %v563
    %v628 = vadd.f32 %v354, %v564
    %v629 = vadd.f32 %v355, %v565
    %v630 = vadd.f32 %v356, %v566
    %v631 = vadd.f32 %v357, %v567
    %v632 = vadd.f32 %v358, %v568
    %v633 = vadd.f32 %v359, %v569
    %v634 = vadd.f32 %v360, %v570
    %v635 = vadd.f32 %v361, %v571
    %v636 = vadd.f32 %v362, %v572
    %v637 = vadd.f32 %v363, %v573
    %v638 = vadd.f32 %v364, %v574
    %v639 = vadd.f32 %v365, %v575
    %v640 = vadd.f32 %v366, %v576
    %v641 = vadd.f32 %v367, %v577
    %v642 = vadd.f32 %v368, %v578
    %v643 = vadd.f32 %v369, %v579
    %v644 = vadd.f32 %v370, %v580
    %v645 = vadd.f32 %v371, %v581
    %v646 = vadd.f32 %v372, %v582
    %v647 = vadd.f32 %v373, %v583
    %v648 = vadd.f32 %v374, %v584
    %v649 = vadd.f32 %v375, %v585
    %v650 = vadd.f32 %v376, %v586
    %v651 = vadd.f32 %v377, %v587
    %v652 = vadd.f32 %v378, %v588
    %v653 = vadd.f32 %v379, %v589
    %v654 = vadd.f32 %v380, %v590
    %v655 = vadd.f32 %v381, %v591
    %v656 = vadd.f32 %v382, %v592
    %v657 = vadd.f32 %v383, %v593
    %v658 = vadd.f32 %v384, %v594
    %v659 = vadd.f32 %v385, %v595
    %v660 = vadd.f32 %v386, %v596
    %v661 = vadd.f32 %v387, %v597
    %662 = vset.pattern.permute.xlu0 2
    %663 = vperm.xlu0 %662, %v36
    %v664 = vpop.permute.xlu0 %663
    %666 = vset.pattern.permute.xlu0 2
    %667 = vperm.xlu0 %666, %v37
    %v668 = vpop.permute.xlu0 %667
    %670 = vset.pattern.permute.xlu0 2
    %671 = vperm.xlu0 %670, %v38
    %v672 = vpop.permute.xlu0 %671
    %674 = vset.pattern.permute.xlu0 2
    %675 = vperm.xlu0 %674, %v39
    %v676 = vpop.permute.xlu0 %675
    %678 = vset.pattern.permute.xlu0 2
    %679 = vperm.xlu0 %678, %v40
    %v680 = vpop.permute.xlu0 %679
    %682 = vset.pattern.permute.xlu0 2
    %683 = vperm.xlu0 %682, %v41
    %v684 = vpop.permute.xlu0 %683
    %686 = vset.pattern.permute.xlu0 2
    %687 = vperm.xlu0 %686, %v42
    %v688 = vpop.permute.xlu0 %687
    %690 = vset.pattern.permute.xlu0 2
    %691 = vperm.xlu0 %690, %v43
    %v692 = vpop.permute.xlu0 %691
    %694 = vset.pattern.permute.xlu0 2
    %695 = vperm.xlu0 %694, %v44
    %v696 = vpop.permute.xlu0 %695
    %698 = vset.pattern.permute.xlu0 2
    %699 = vperm.xlu0 %698, %v45
    %v700 = vpop.permute.xlu0 %699
    %702 = vset.pattern.permute.xlu0 2
    %703 = vperm.xlu0 %702, %v46
    %v704 = vpop.permute.xlu0 %703
    %706 = vset.pattern.permute.xlu0 2
    %707 = vperm.xlu0 %706, %v47
    %v708 = vpop.permute.xlu0 %707
    %710 = vset.pattern.permute.xlu0 2
    %711 = vperm.xlu0 %710, %v48
    %v712 = vpop.permute.xlu0 %711
    %714 = vset.pattern.permute.xlu0 2
    %715 = vperm.xlu0 %714, %v49
    %v716 = vpop.permute.xlu0 %715
    %718 = vset.pattern.permute.xlu0 2
    %719 = vperm.xlu0 %718, %v50
    %v720 = vpop.permute.xlu0 %719
    %722 = vset.pattern.permute.xlu0 2
    %723 = vperm.xlu0 %722, %v51
    %v724 = vpop.permute.xlu0 %723
    %726 = vset.pattern.permute.xlu0 2
    %727 = vperm.xlu0 %726, %v52
    %v728 = vpop.permute.xlu0 %727
    %730 = vset.pattern.permute.xlu0 2
    %731 = vperm.xlu0 %730, %v53
    %v732 = vpop.permute.xlu0 %731
    %734 = vset.pattern.permute.xlu0 2
    %735 = vperm.xlu0 %734, %v54
    %v736 = vpop.permute.xlu0 %735
    %738 = vset.pattern.permute.xlu0 2
    %739 = vperm.xlu0 %738, %v55
    %v740 = vpop.permute.xlu0 %739
    %742 = vset.pattern.permute.xlu0 2
    %743 = vperm.xlu0 %742, %v56
    %v744 = vpop.permute.xlu0 %743
    %746 = vset.pattern.permute.xlu0 2
    %747 = vperm.xlu0 %746, %v57
    %v748 = vpop.permute.xlu0 %747
    %750 = vset.pattern.permute.xlu0 2
    %751 = vperm.xlu0 %750, %v58
    %v752 = vpop.permute.xlu0 %751
    %754 = vset.pattern.permute.xlu0 2
    %755 = vperm.xlu0 %754, %v59
    %v756 = vpop.permute.xlu0 %755
    %758 = vset.pattern.permute.xlu0 2
    %759 = vperm.xlu0 %758, %v60
    %v760 = vpop.permute.xlu0 %759
    %762 = vset.pattern.permute.xlu0 2
    %763 = vperm.xlu0 %762, %v61
    %v764 = vpop.permute.xlu0 %763
    %766 = vset.pattern.permute.xlu0 2
    %767 = vperm.xlu0 %766, %v62
    %v768 = vpop.permute.xlu0 %767
    %770 = vset.pattern.permute.xlu0 2
    %771 = vperm.xlu0 %770, %v63
    %v772 = vpop.permute.xlu0 %771
    %774 = vset.pattern.permute.xlu0 2
    %775 = vperm.xlu0 %774, %v64
    %v776 = vpop.permute.xlu0 %775
    %778 = vset.pattern.permute.xlu0 2
    %779 = vperm.xlu0 %778, %v65
    %v780 = vpop.permute.xlu0 %779
    %782 = vset.pattern.permute.xlu0 2
    %783 = vperm.xlu0 %782, %v66
    %v784 = vpop.permute.xlu0 %783
    %786 = vset.pattern.permute.xlu0 2
    %787 = vperm.xlu0 %786, %v67
    %v788 = vpop.permute.xlu0 %787
    %v790 = vlaneseq
    %v791 = vshrl.u32 %v790, 7
    %v792 = vsub.s32 2, %v791
    %v793 = vrot.slane %v68, %v792
    %v794 = vlaneseq
    %v795 = vshrl.u32 %v794, 7
    %v796 = vsub.s32 6, %v795
    %v797 = vrot.slane %v68, %v796
    %v800 = vlaneseq
    %v801 = vshrl.u32 %v800, 7
    %v802 = vsub.s32 2, %v801
    %v803 = vrot.slane %v793, %v802
    %v804 = vlaneseq
    %v805 = vshrl.u32 %v804, 7
    %v806 = vsub.s32 2, %v805
    %v807 = vrot.slane %v797, %v806
    %v808 = vmul.f32 %v664, %v803
    %v809 = vmul.f32 %v664, %v807
    %v810 = vmul.f32 %v668, %v803
    %v811 = vmul.f32 %v668, %v807
    %v812 = vmul.f32 %v672, %v803
    %v813 = vmul.f32 %v672, %v807
    %v814 = vmul.f32 %v676, %v803
    %v815 = vmul.f32 %v676, %v807
    %v816 = vmul.f32 %v680, %v803
    %v817 = vmul.f32 %v680, %v807
    %v818 = vmul.f32 %v684, %v803
    %v819 = vmul.f32 %v684, %v807
    %v820 = vmul.f32 %v688, %v803
    %v821 = vmul.f32 %v688, %v807
    %v822 = vmul.f32 %v692, %v803
    %v823 = vmul.f32 %v692, %v807
    %v824 = vmul.f32 %v696, %v803
    %v825 = vmul.f32 %v696, %v807
    %v826 = vmul.f32 %v700, %v803
    %v827 = vmul.f32 %v700, %v807
    %v828 = vmul.f32 %v704, %v803
    %v829 = vmul.f32 %v704, %v807
    %v830 = vmul.f32 %v708, %v803
    %v831 = vmul.f32 %v708, %v807
    %v832 = vmul.f32 %v712, %v803
    %v833 = vmul.f32 %v712, %v807
    %v834 = vmul.f32 %v716, %v803
    %v835 = vmul.f32 %v716, %v807
    %v836 = vmul.f32 %v720, %v803
    %v837 = vmul.f32 %v720, %v807
    %v838 = vmul.f32 %v724, %v803
    %v839 = vmul.f32 %v724, %v807
    %v840 = vmul.f32 %v728, %v803
    %v841 = vmul.f32 %v728, %v807
    %v842 = vmul.f32 %v732, %v803
    %v843 = vmul.f32 %v732, %v807
    %v844 = vmul.f32 %v736, %v803
    %v845 = vmul.f32 %v736, %v807
    %v846 = vmul.f32 %v740, %v803
    %v847 = vmul.f32 %v740, %v807
    %v848 = vmul.f32 %v744, %v803
    %v849 = vmul.f32 %v744, %v807
    %v850 = vmul.f32 %v748, %v803
    %v851 = vmul.f32 %v748, %v807
    %v852 = vmul.f32 %v752, %v803
    %v853 = vmul.f32 %v752, %v807
    %v854 = vmul.f32 %v756, %v803
    %v855 = vmul.f32 %v756, %v807
    %v856 = vmul.f32 %v760, %v803
    %v857 = vmul.f32 %v760, %v807
    %v858 = vmul.f32 %v764, %v803
    %v859 = vmul.f32 %v764, %v807
    %v860 = vmul.f32 %v768, %v803
    %v861 = vmul.f32 %v768, %v807
    %v862 = vmul.f32 %v772, %v803
    %v863 = vmul.f32 %v772, %v807
    %v864 = vmul.f32 %v776, %v803
    %v865 = vmul.f32 %v776, %v807
    %v866 = vmul.f32 %v780, %v803
    %v867 = vmul.f32 %v780, %v807
    %v868 = vmul.f32 %v784, %v803
    %v869 = vmul.f32 %v784, %v807
    %v870 = vmul.f32 %v788, %v803
    %v871 = vmul.f32 %v788, %v807
    %v872 = vadd.f32 %v598, %v808
    %v873 = vadd.f32 %v599, %v809
    %v874 = vadd.f32 %v600, %v810
    %v875 = vadd.f32 %v601, %v811
    %v876 = vadd.f32 %v602, %v812
    %v877 = vadd.f32 %v603, %v813
    %v878 = vadd.f32 %v604, %v814
    %v879 = vadd.f32 %v605, %v815
    %v880 = vadd.f32 %v606, %v816
    %v881 = vadd.f32 %v607, %v817
    %v882 = vadd.f32 %v608, %v818
    %v883 = vadd.f32 %v609, %v819
    %v884 = vadd.f32 %v610, %v820
    %v885 = vadd.f32 %v611, %v821
    %v886 = vadd.f32 %v612, %v822
    %v887 = vadd.f32 %v613, %v823
    %v888 = vadd.f32 %v614, %v824
    %v889 = vadd.f32 %v615, %v825
    %v890 = vadd.f32 %v616, %v826
    %v891 = vadd.f32 %v617, %v827
    %v892 = vadd.f32 %v618, %v828
    %v893 = vadd.f32 %v619, %v829
    %v894 = vadd.f32 %v620, %v830
    %v895 = vadd.f32 %v621, %v831
    %v896 = vadd.f32 %v622, %v832
    %v897 = vadd.f32 %v623, %v833
    %v898 = vadd.f32 %v624, %v834
    %v899 = vadd.f32 %v625, %v835
    %v900 = vadd.f32 %v626, %v836
    %v901 = vadd.f32 %v627, %v837
    %v902 = vadd.f32 %v628, %v838
    %v903 = vadd.f32 %v629, %v839
    %v904 = vadd.f32 %v630, %v840
    %v905 = vadd.f32 %v631, %v841
    %v906 = vadd.f32 %v632, %v842
    %v907 = vadd.f32 %v633, %v843
    %v908 = vadd.f32 %v634, %v844
    %v909 = vadd.f32 %v635, %v845
    %v910 = vadd.f32 %v636, %v846
    %v911 = vadd.f32 %v637, %v847
    %v912 = vadd.f32 %v638, %v848
    %v913 = vadd.f32 %v639, %v849
    %v914 = vadd.f32 %v640, %v850
    %v915 = vadd.f32 %v641, %v851
    %v916 = vadd.f32 %v642, %v852
    %v917 = vadd.f32 %v643, %v853
    %v918 = vadd.f32 %v644, %v854
    %v919 = vadd.f32 %v645, %v855
    %v920 = vadd.f32 %v646, %v856
    %v921 = vadd.f32 %v647, %v857
    %v922 = vadd.f32 %v648, %v858
    %v923 = vadd.f32 %v649, %v859
    %v924 = vadd.f32 %v650, %v860
    %v925 = vadd.f32 %v651, %v861
    %v926 = vadd.f32 %v652, %v862
    %v927 = vadd.f32 %v653, %v863
    %v928 = vadd.f32 %v654, %v864
    %v929 = vadd.f32 %v655, %v865
    %v930 = vadd.f32 %v656, %v866
    %v931 = vadd.f32 %v657, %v867
    %v932 = vadd.f32 %v658, %v868
    %v933 = vadd.f32 %v659, %v869
    %v934 = vadd.f32 %v660, %v870
    %v935 = vadd.f32 %v661, %v871
    %v936 = vmul.f32 %v872, 0.01
    %v937 = vmul.f32 %v873, 0.01
    %v938 = vmul.f32 %v874, 0.01
    %v939 = vmul.f32 %v875, 0.01
    %v940 = vmul.f32 %v876, 0.01
    %v941 = vmul.f32 %v877, 0.01
    %v942 = vmul.f32 %v878, 0.01
    %v943 = vmul.f32 %v879, 0.01
    %v944 = vmul.f32 %v880, 0.01
    %v945 = vmul.f32 %v881, 0.01
    %v946 = vmul.f32 %v882, 0.01
    %v947 = vmul.f32 %v883, 0.01
    %v948 = vmul.f32 %v884, 0.01
    %v949 = vmul.f32 %v885, 0.01
    %v950 = vmul.f32 %v886, 0.01
    %v951 = vmul.f32 %v887, 0.01
    %v952 = vmul.f32 %v888, 0.01
    %v953 = vmul.f32 %v889, 0.01
    %v954 = vmul.f32 %v890, 0.01
    %v955 = vmul.f32 %v891, 0.01
    %v956 = vmul.f32 %v892, 0.01
    %v957 = vmul.f32 %v893, 0.01
    %v958 = vmul.f32 %v894, 0.01
    %v959 = vmul.f32 %v895, 0.01
    %v960 = vmul.f32 %v896, 0.01
    %v961 = vmul.f32 %v897, 0.01
    %v962 = vmul.f32 %v898, 0.01
    %v963 = vmul.f32 %v899, 0.01
    %v964 = vmul.f32 %v900, 0.01
    %v965 = vmul.f32 %v901, 0.01
    %v966 = vmul.f32 %v902, 0.01
    %v967 = vmul.f32 %v903, 0.01
    %v968 = vmul.f32 %v904, 0.01
    %v969 = vmul.f32 %v905, 0.01
    %v970 = vmul.f32 %v906, 0.01
    %v971 = vmul.f32 %v907, 0.01
    %v972 = vmul.f32 %v908, 0.01
    %v973 = vmul.f32 %v909, 0.01
    %v974 = vmul.f32 %v910, 0.01
    %v975 = vmul.f32 %v911, 0.01
    %v976 = vmul.f32 %v912, 0.01
    %v977 = vmul.f32 %v913, 0.01
    %v978 = vmul.f32 %v914, 0.01
    %v979 = vmul.f32 %v915, 0.01
    %v980 = vmul.f32 %v916, 0.01
    %v981 = vmul.f32 %v917, 0.01
    %v982 = vmul.f32 %v918, 0.01
    %v983 = vmul.f32 %v919, 0.01
    %v984 = vmul.f32 %v920, 0.01
    %v985 = vmul.f32 %v921, 0.01
    %v986 = vmul.f32 %v922, 0.01
    %v987 = vmul.f32 %v923, 0.01
    %v988 = vmul.f32 %v924, 0.01
    %v989 = vmul.f32 %v925, 0.01
    %v990 = vmul.f32 %v926, 0.01
    %v991 = vmul.f32 %v927, 0.01
    %v992 = vmul.f32 %v928, 0.01
    %v993 = vmul.f32 %v929, 0.01
    %v994 = vmul.f32 %v930, 0.01
    %v995 = vmul.f32 %v931, 0.01
    %v996 = vmul.f32 %v932, 0.01
    %v997 = vmul.f32 %v933, 0.01
    %v998 = vmul.f32 %v934, 0.01
    %v999 = vmul.f32 %v935, 0.01
    %v1000 = vmax.f32 %v872, %v936
    %v1001 = vmax.f32 %v873, %v937
    %v1002 = vmax.f32 %v874, %v938
    %v1003 = vmax.f32 %v875, %v939
    %v1004 = vmax.f32 %v876, %v940
    %v1005 = vmax.f32 %v877, %v941
    %v1006 = vmax.f32 %v878, %v942
    %v1007 = vmax.f32 %v879, %v943
    %v1008 = vmax.f32 %v880, %v944
    %v1009 = vmax.f32 %v881, %v945
    %v1010 = vmax.f32 %v882, %v946
    %v1011 = vmax.f32 %v883, %v947
    %v1012 = vmax.f32 %v884, %v948
    %v1013 = vmax.f32 %v885, %v949
    %v1014 = vmax.f32 %v886, %v950
    %v1015 = vmax.f32 %v887, %v951
    %v1016 = vmax.f32 %v888, %v952
    %v1017 = vmax.f32 %v889, %v953
    %v1018 = vmax.f32 %v890, %v954
    %v1019 = vmax.f32 %v891, %v955
    %v1020 = vmax.f32 %v892, %v956
    %v1021 = vmax.f32 %v893, %v957
    %v1022 = vmax.f32 %v894, %v958
    %v1023 = vmax.f32 %v895, %v959
    %v1024 = vmax.f32 %v896, %v960
    %v1025 = vmax.f32 %v897, %v961
    %v1026 = vmax.f32 %v898, %v962
    %v1027 = vmax.f32 %v899, %v963
    %v1028 = vmax.f32 %v900, %v964
    %v1029 = vmax.f32 %v901, %v965
    %v1030 = vmax.f32 %v902, %v966
    %v1031 = vmax.f32 %v903, %v967
    %v1032 = vmax.f32 %v904, %v968
    %v1033 = vmax.f32 %v905, %v969
    %v1034 = vmax.f32 %v906, %v970
    %v1035 = vmax.f32 %v907, %v971
    %v1036 = vmax.f32 %v908, %v972
    %v1037 = vmax.f32 %v909, %v973
    %v1038 = vmax.f32 %v910, %v974
    %v1039 = vmax.f32 %v911, %v975
    %v1040 = vmax.f32 %v912, %v976
    %v1041 = vmax.f32 %v913, %v977
    %v1042 = vmax.f32 %v914, %v978
    %v1043 = vmax.f32 %v915, %v979
    %v1044 = vmax.f32 %v916, %v980
    %v1045 = vmax.f32 %v917, %v981
    %v1046 = vmax.f32 %v918, %v982
    %v1047 = vmax.f32 %v919, %v983
    %v1048 = vmax.f32 %v920, %v984
    %v1049 = vmax.f32 %v921, %v985
    %v1050 = vmax.f32 %v922, %v986
    %v1051 = vmax.f32 %v923, %v987
    %v1052 = vmax.f32 %v924, %v988
    %v1053 = vmax.f32 %v925, %v989
    %v1054 = vmax.f32 %v926, %v990
    %v1055 = vmax.f32 %v927, %v991
    %v1056 = vmax.f32 %v928, %v992
    %v1057 = vmax.f32 %v929, %v993
    %v1058 = vmax.f32 %v930, %v994
    %v1059 = vmax.f32 %v931, %v995
    %v1060 = vmax.f32 %v932, %v996
    %v1061 = vmax.f32 %v933, %v997
    %v1062 = vmax.f32 %v934, %v998
    %v1063 = vmax.f32 %v935, %v999
    %v1064 = vpack.c.bf16 %v1002, %v1000
    %v1065 = vpack.c.bf16 %v1003, %v1001
    %v1066 = vpack.c.bf16 %v1006, %v1004
    %v1067 = vpack.c.bf16 %v1007, %v1005
    %v1068 = vpack.c.bf16 %v1010, %v1008
    %v1069 = vpack.c.bf16 %v1011, %v1009
    %v1070 = vpack.c.bf16 %v1014, %v1012
    %v1071 = vpack.c.bf16 %v1015, %v1013
    %v1072 = vpack.c.bf16 %v1018, %v1016
    %v1073 = vpack.c.bf16 %v1019, %v1017
    %v1074 = vpack.c.bf16 %v1022, %v1020
    %v1075 = vpack.c.bf16 %v1023, %v1021
    %v1076 = vpack.c.bf16 %v1026, %v1024
    %v1077 = vpack.c.bf16 %v1027, %v1025
    %v1078 = vpack.c.bf16 %v1030, %v1028
    %v1079 = vpack.c.bf16 %v1031, %v1029
    %v1080 = vpack.c.bf16 %v1034, %v1032
    %v1081 = vpack.c.bf16 %v1035, %v1033
    %v1082 = vpack.c.bf16 %v1038, %v1036
    %v1083 = vpack.c.bf16 %v1039, %v1037
    %v1084 = vpack.c.bf16 %v1042, %v1040
    %v1085 = vpack.c.bf16 %v1043, %v1041
    %v1086 = vpack.c.bf16 %v1046, %v1044
    %v1087 = vpack.c.bf16 %v1047, %v1045
    %v1088 = vpack.c.bf16 %v1050, %v1048
    %v1089 = vpack.c.bf16 %v1051, %v1049
    %v1090 = vpack.c.bf16 %v1054, %v1052
    %v1091 = vpack.c.bf16 %v1055, %v1053
    %v1092 = vpack.c.bf16 %v1058, %v1056
    %v1093 = vpack.c.bf16 %v1059, %v1057
    %v1094 = vpack.c.bf16 %v1062, %v1060
    %v1095 = vpack.c.bf16 %v1063, %v1061
    %v1096 = vld [vmem:[#allocation2] sm:$0xf]
    %v1097 = vld [vmem:[#allocation2 + $0x4] sm:$0xf]
    %v1098 = vld [vmem:[#allocation2 + $0x8] sm:$0xf]
    %v1099 = vld [vmem:[#allocation2 + $0xc] sm:$0xf]
    %v1100 = vld [vmem:[#allocation2 + $0x10] sm:$0xf]
    %v1101 = vld [vmem:[#allocation2 + $0x14] sm:$0xf]
    %v1102 = vld [vmem:[#allocation2 + $0x18] sm:$0xf]
    %v1103 = vld [vmem:[#allocation2 + $0x1c] sm:$0xf]
    %v1104 = vld [vmem:[#allocation2 + $0x20] sm:$0xf]
    %v1105 = vld [vmem:[#allocation2 + $0x24] sm:$0xf]
    %v1106 = vld [vmem:[#allocation2 + $0x28] sm:$0xf]
    %v1107 = vld [vmem:[#allocation2 + $0x2c] sm:$0xf]
    %v1108 = vld [vmem:[#allocation2 + $0x30] sm:$0xf]
    %v1109 = vld [vmem:[#allocation2 + $0x34] sm:$0xf]
    %v1110 = vld [vmem:[#allocation2 + $0x38] sm:$0xf]
    %v1111 = vld [vmem:[#allocation2 + $0x3c] sm:$0xf]
    %v1112 = vld [vmem:[#allocation2 + $0x40] sm:$0xf]
    %v1113 = vld [vmem:[#allocation2 + $0x44] sm:$0xf]
    %v1114 = vld [vmem:[#allocation2 + $0x48] sm:$0xf]
    %v1115 = vld [vmem:[#allocation2 + $0x4c] sm:$0xf]
    %v1116 = vld [vmem:[#allocation2 + $0x50] sm:$0xf]
    %v1117 = vld [vmem:[#allocation2 + $0x54] sm:$0xf]
    %v1118 = vld [vmem:[#allocation2 + $0x58] sm:$0xf]
    %v1119 = vld [vmem:[#allocation2 + $0x5c] sm:$0xf]
    %v1120 = vld [vmem:[#allocation2 + $0x60] sm:$0xf]
    %v1121 = vld [vmem:[#allocation2 + $0x64] sm:$0xf]
    %v1122 = vld [vmem:[#allocation2 + $0x68] sm:$0xf]
    %v1123 = vld [vmem:[#allocation2 + $0x6c] sm:$0xf]
    %v1124 = vld [vmem:[#allocation2 + $0x70] sm:$0xf]
    %v1125 = vld [vmem:[#allocation2 + $0x74] sm:$0xf]
    %v1126 = vld [vmem:[#allocation2 + $0x78] sm:$0xf]
    %v1127 = vld [vmem:[#allocation2 + $0x7c] sm:$0xf]
    %v1128 = vld [vmem:[%s4] sm:$0x1]
    %v1130 = vlaneseq
    %v1131 = vshrl.u32 %v1130, 7
    %v1132 = vsub.s32 0, %v1131
    %v1133 = vrot.slane %v1128, %v1132
    %v1167 = vunpack.c.l.b16 %v1096
    %v1168 = vunpack.c.l.b16 %v1097
    %v1169 = vunpack.c.l.b16 %v1098
    %v1170 = vunpack.c.l.b16 %v1099
    %v1171 = vunpack.c.l.b16 %v1100
    %v1172 = vunpack.c.l.b16 %v1101
    %v1173 = vunpack.c.l.b16 %v1102
    %v1174 = vunpack.c.l.b16 %v1103
    %v1175 = vunpack.c.l.b16 %v1104
    %v1176 = vunpack.c.l.b16 %v1105
    %v1177 = vunpack.c.l.b16 %v1106
    %v1178 = vunpack.c.l.b16 %v1107
    %v1179 = vunpack.c.l.b16 %v1108
    %v1180 = vunpack.c.l.b16 %v1109
    %v1181 = vunpack.c.l.b16 %v1110
    %v1182 = vunpack.c.l.b16 %v1111
    %v1183 = vunpack.c.l.b16 %v1112
    %v1184 = vunpack.c.l.b16 %v1113
    %v1185 = vunpack.c.l.b16 %v1114
    %v1186 = vunpack.c.l.b16 %v1115
    %v1187 = vunpack.c.l.b16 %v1116
    %v1188 = vunpack.c.l.b16 %v1117
    %v1189 = vunpack.c.l.b16 %v1118
    %v1190 = vunpack.c.l.b16 %v1119
    %v1191 = vunpack.c.l.b16 %v1120
    %v1192 = vunpack.c.l.b16 %v1121
    %v1193 = vunpack.c.l.b16 %v1122
    %v1194 = vunpack.c.l.b16 %v1123
    %v1195 = vunpack.c.l.b16 %v1124
    %v1196 = vunpack.c.l.b16 %v1125
    %v1197 = vunpack.c.l.b16 %v1126
    %v1198 = vunpack.c.l.b16 %v1127
    %v1199 = vpack.c.b16 %v1168, %v1167
    %v1200 = vpack.c.b16 %v1170, %v1169
    %v1201 = vpack.c.b16 %v1172, %v1171
    %v1202 = vpack.c.b16 %v1174, %v1173
    %v1203 = vpack.c.b16 %v1176, %v1175
    %v1204 = vpack.c.b16 %v1178, %v1177
    %v1205 = vpack.c.b16 %v1180, %v1179
    %v1206 = vpack.c.b16 %v1182, %v1181
    %v1207 = vpack.c.b16 %v1184, %v1183
    %v1208 = vpack.c.b16 %v1186, %v1185
    %v1209 = vpack.c.b16 %v1188, %v1187
    %v1210 = vpack.c.b16 %v1190, %v1189
    %v1211 = vpack.c.b16 %v1192, %v1191
    %v1212 = vpack.c.b16 %v1194, %v1193
    %v1213 = vpack.c.b16 %v1196, %v1195
    %v1214 = vpack.c.b16 %v1198, %v1197
    %1231 = vmatprep.subr.bf16.mxu0 0
    %1232 = vmatpush1.bf16.msra.mxu0 %v1206
    %1233 = vmatprep.subr.bf16.mxu0 0
    %1234 = vmatpush1.bf16.msra.mxu0 %v1205
    %1235 = vmatprep.subr.bf16.mxu0 0
    %1236 = vmatpush1.bf16.msra.mxu0 %v1204
    %1237 = vmatprep.subr.bf16.mxu0 0
    %1238 = vmatpush1.bf16.msra.mxu0 %v1203
    %1239 = vmatprep.subr.bf16.mxu0 0
    %1240 = vmatpush1.bf16.msra.mxu0 %v1202
    %1241 = vmatprep.subr.bf16.mxu0 0
    %1242 = vmatpush1.bf16.msra.mxu0 %v1201
    %1243 = vmatprep.subr.bf16.mxu0 0
    %1244 = vmatpush1.bf16.msra.mxu0 %v1200
    %1245 = vmatprep.subr.bf16.mxu0 0
    %1246 = vmatpush1.bf16.msra.mxu0 %v1199
    %1247 = vmatprep.subr.bf16.mxu0 0
    %1248 = vmatpush2.bf16.msra.mxu0 %v1214
    %1249 = vmatprep.subr.bf16.mxu0 0
    %1250 = vmatpush2.bf16.msra.mxu0 %v1213
    %1251 = vmatprep.subr.bf16.mxu0 0
    %1252 = vmatpush2.bf16.msra.mxu0 %v1212
    %1253 = vmatprep.subr.bf16.mxu0 0
    %1254 = vmatpush2.bf16.msra.mxu0 %v1211
    %1255 = vmatprep.subr.bf16.mxu0 0
    %1256 = vmatpush2.bf16.msra.mxu0 %v1210
    %1257 = vmatprep.subr.bf16.mxu0 0
    %1258 = vmatpush2.bf16.msra.mxu0 %v1209
    %1259 = vmatprep.subr.bf16.mxu0 0
    %1260 = vmatpush2.bf16.msra.mxu0 %v1208
    %1261 = vmatprep.subr.bf16.mxu0 0
    %1262 = vmatpush2.bf16.msra.mxu0 %v1207
    %1263 = vmatprep.mubr.bf16.mxu0 %v1065
    %1264 = vmatmul.mubr.bf16.gmra.mxu0 %v1064
    %v1265 = vpop.f32.mrf.mxu0
    %v1266 = vadd.f32 %v1133, %v1265
    %v1267 = vpop.f32.mrf.mxu0
    %v1268 = vpop.f32.mrf.mxu0
    %v1269 = vadd.f32 %v1133, %v1268
    %v1270 = vpop.f32.mrf.mxu0
    %1271 = vmatprep.mubr.bf16.mxu0 %v1067
    %1272 = vmatmul.mubr.bf16.gmra.mxu0 %v1066
    %v1273 = vpop.f32.mrf.mxu0
    %v1274 = vadd.f32 %v1133, %v1273
    %v1275 = vpop.f32.mrf.mxu0
    %v1276 = vpop.f32.mrf.mxu0
    %v1277 = vadd.f32 %v1133, %v1276
    %v1278 = vpop.f32.mrf.mxu0
    %1279 = vmatprep.mubr.bf16.mxu0 %v1069
    %1280 = vmatmul.mubr.bf16.gmra.mxu0 %v1068
    %v1281 = vpop.f32.mrf.mxu0
    %v1282 = vadd.f32 %v1133, %v1281
    %v1283 = vpop.f32.mrf.mxu0
    %v1284 = vpop.f32.mrf.mxu0
    %v1285 = vadd.f32 %v1133, %v1284
    %v1286 = vpop.f32.mrf.mxu0
    %1287 = vmatprep.mubr.bf16.mxu0 %v1071
    %1288 = vmatmul.mubr.bf16.gmra.mxu0 %v1070
    %v1289 = vpop.f32.mrf.mxu0
    %v1290 = vadd.f32 %v1133, %v1289
    %v1291 = vpop.f32.mrf.mxu0
    %v1292 = vpop.f32.mrf.mxu0
    %v1293 = vadd.f32 %v1133, %v1292
    %v1294 = vpop.f32.mrf.mxu0
    %1295 = vmatprep.mubr.bf16.mxu0 %v1073
    %1296 = vmatmul.mubr.bf16.gmra.mxu0 %v1072
    %v1297 = vpop.f32.mrf.mxu0
    %v1298 = vadd.f32 %v1133, %v1297
    %v1299 = vpop.f32.mrf.mxu0
    %v1300 = vpop.f32.mrf.mxu0
    %v1301 = vadd.f32 %v1133, %v1300
    %v1302 = vpop.f32.mrf.mxu0
    %1303 = vmatprep.mubr.bf16.mxu0 %v1075
    %1304 = vmatmul.mubr.bf16.gmra.mxu0 %v1074
    %v1305 = vpop.f32.mrf.mxu0
    %v1306 = vadd.f32 %v1133, %v1305
    %v1307 = vpop.f32.mrf.mxu0
    %v1308 = vpop.f32.mrf.mxu0
    %v1309 = vadd.f32 %v1133, %v1308
    %v1310 = vpop.f32.mrf.mxu0
    %1311 = vmatprep.mubr.bf16.mxu0 %v1077
    %1312 = vmatmul.mubr.bf16.gmra.mxu0 %v1076
    %v1313 = vpop.f32.mrf.mxu0
    %v1314 = vadd.f32 %v1133, %v1313
    %v1315 = vpop.f32.mrf.mxu0
    %v1316 = vpop.f32.mrf.mxu0
    %v1317 = vadd.f32 %v1133, %v1316
    %v1318 = vpop.f32.mrf.mxu0
    %1319 = vmatprep.mubr.bf16.mxu0 %v1079
    %1320 = vmatmul.mubr.bf16.gmra.mxu0 %v1078
    %v1321 = vpop.f32.mrf.mxu0
    %v1322 = vadd.f32 %v1133, %v1321
    %v1323 = vpop.f32.mrf.mxu0
    %v1324 = vpop.f32.mrf.mxu0
    %v1325 = vadd.f32 %v1133, %v1324
    %v1326 = vpop.f32.mrf.mxu0
    %1327 = vmatprep.mubr.bf16.mxu0 %v1081
    %1328 = vmatmul.mubr.bf16.gmra.mxu0 %v1080
    %v1329 = vpop.f32.mrf.mxu0
    %v1330 = vadd.f32 %v1133, %v1329
    %v1331 = vpop.f32.mrf.mxu0
    %v1332 = vpop.f32.mrf.mxu0
    %v1333 = vadd.f32 %v1133, %v1332
    %v1334 = vpop.f32.mrf.mxu0
    %1335 = vmatprep.mubr.bf16.mxu0 %v1083
    %1336 = vmatmul.mubr.bf16.gmra.mxu0 %v1082
    %v1337 = vpop.f32.mrf.mxu0
    %v1338 = vadd.f32 %v1133, %v1337
    %v1339 = vpop.f32.mrf.mxu0
    %v1340 = vpop.f32.mrf.mxu0
    %v1341 = vadd.f32 %v1133, %v1340
    %v1342 = vpop.f32.mrf.mxu0
    %1343 = vmatprep.mubr.bf16.mxu0 %v1085
    %1344 = vmatmul.mubr.bf16.gmra.mxu0 %v1084
    %v1345 = vpop.f32.mrf.mxu0
    %v1346 = vadd.f32 %v1133, %v1345
    %v1347 = vpop.f32.mrf.mxu0
    %v1348 = vpop.f32.mrf.mxu0
    %v1349 = vadd.f32 %v1133, %v1348
    %v1350 = vpop.f32.mrf.mxu0
    %1351 = vmatprep.mubr.bf16.mxu0 %v1087
    %1352 = vmatmul.mubr.bf16.gmra.mxu0 %v1086
    %v1353 = vpop.f32.mrf.mxu0
    %v1354 = vadd.f32 %v1133, %v1353
    %v1355 = vpop.f32.mrf.mxu0
    %v1356 = vpop.f32.mrf.mxu0
    %v1357 = vadd.f32 %v1133, %v1356
    %v1358 = vpop.f32.mrf.mxu0
    %1359 = vmatprep.mubr.bf16.mxu0 %v1089
    %1360 = vmatmul.mubr.bf16.gmra.mxu0 %v1088
    %v1361 = vpop.f32.mrf.mxu0
    %v1362 = vadd.f32 %v1133, %v1361
    %v1363 = vpop.f32.mrf.mxu0
    %v1364 = vpop.f32.mrf.mxu0
    %v1365 = vadd.f32 %v1133, %v1364
    %v1366 = vpop.f32.mrf.mxu0
    %1367 = vmatprep.mubr.bf16.mxu0 %v1091
    %1368 = vmatmul.mubr.bf16.gmra.mxu0 %v1090
    %v1369 = vpop.f32.mrf.mxu0
    %v1370 = vadd.f32 %v1133, %v1369
    %v1371 = vpop.f32.mrf.mxu0
    %v1372 = vpop.f32.mrf.mxu0
    %v1373 = vadd.f32 %v1133, %v1372
    %v1374 = vpop.f32.mrf.mxu0
    %1375 = vmatprep.mubr.bf16.mxu0 %v1093
    %1376 = vmatmul.mubr.bf16.gmra.mxu0 %v1092
    %v1377 = vpop.f32.mrf.mxu0
    %v1378 = vadd.f32 %v1133, %v1377
    %v1379 = vpop.f32.mrf.mxu0
    %v1380 = vpop.f32.mrf.mxu0
    %v1381 = vadd.f32 %v1133, %v1380
    %v1382 = vpop.f32.mrf.mxu0
    %1383 = vmatprep.mubr.bf16.mxu0 %v1095
    %1384 = vmatmul.mubr.bf16.gmra.mxu0 %v1094
    %v1385 = vpop.f32.mrf.mxu0
    %v1386 = vadd.f32 %v1133, %v1385
    %v1387 = vpop.f32.mrf.mxu0
    %v1388 = vpop.f32.mrf.mxu0
    %v1389 = vadd.f32 %v1133, %v1388
    %v1390 = vpop.f32.mrf.mxu0
    %1391 = vdwg.mxu0
    %vm1392 = vcmask 203776
    %1393 = vst.msk [vmem:[#allocation5] sm:$0xff] %vm1392, %v1266
    %1394 = vst.msk [vmem:[#allocation5 + $0x8] sm:$0xff] %vm1392, %v1269
    %1395 = vst.msk [vmem:[#allocation5 + $0x10] sm:$0xff] %vm1392, %v1274
    %1396 = vst.msk [vmem:[#allocation5 + $0x18] sm:$0xff] %vm1392, %v1277
    %1397 = vst.msk [vmem:[#allocation5 + $0x20] sm:$0xff] %vm1392, %v1282
    %1398 = vst.msk [vmem:[#allocation5 + $0x28] sm:$0xff] %vm1392, %v1285
    %1399 = vst.msk [vmem:[#allocation5 + $0x30] sm:$0xff] %vm1392, %v1290
    %1400 = vst.msk [vmem:[#allocation5 + $0x38] sm:$0xff] %vm1392, %v1293
    %1401 = vst.msk [vmem:[#allocation5 + $0x40] sm:$0xff] %vm1392, %v1298
    %1402 = vst.msk [vmem:[#allocation5 + $0x48] sm:$0xff] %vm1392, %v1301
    %1403 = vst.msk [vmem:[#allocation5 + $0x50] sm:$0xff] %vm1392, %v1306
    %1404 = vst.msk [vmem:[#allocation5 + $0x58] sm:$0xff] %vm1392, %v1309
    %1405 = vst.msk [vmem:[#allocation5 + $0x60] sm:$0xff] %vm1392, %v1314
    %1406 = vst.msk [vmem:[#allocation5 + $0x68] sm:$0xff] %vm1392, %v1317
    %1407 = vst.msk [vmem:[#allocation5 + $0x70] sm:$0xff] %vm1392, %v1322
    %1408 = vst.msk [vmem:[#allocation5 + $0x78] sm:$0xff] %vm1392, %v1325
    %1409 = vst.msk [vmem:[#allocation5 + $0x80] sm:$0xff] %vm1392, %v1330
    %1410 = vst.msk [vmem:[#allocation5 + $0x88] sm:$0xff] %vm1392, %v1333
    %1411 = vst.msk [vmem:[#allocation5 + $0x90] sm:$0xff] %vm1392, %v1338
    %1412 = vst.msk [vmem:[#allocation5 + $0x98] sm:$0xff] %vm1392, %v1341
    %1413 = vst.msk [vmem:[#allocation5 + $0xa0] sm:$0xff] %vm1392, %v1346
    %1414 = vst.msk [vmem:[#allocation5 + $0xa8] sm:$0xff] %vm1392, %v1349
    %1415 = vst.msk [vmem:[#allocation5 + $0xb0] sm:$0xff] %vm1392, %v1354
    %1416 = vst.msk [vmem:[#allocation5 + $0xb8] sm:$0xff] %vm1392, %v1357
    %1417 = vst.msk [vmem:[#allocation5 + $0xc0] sm:$0xff] %vm1392, %v1362
    %1418 = vst.msk [vmem:[#allocation5 + $0xc8] sm:$0xff] %vm1392, %v1365
    %1419 = vst.msk [vmem:[#allocation5 + $0xd0] sm:$0xff] %vm1392, %v1370
    %1420 = vst.msk [vmem:[#allocation5 + $0xd8] sm:$0xff] %vm1392, %v1373
    %1421 = vst.msk [vmem:[#allocation5 + $0xe0] sm:$0xff] %vm1392, %v1378
    %1422 = vst.msk [vmem:[#allocation5 + $0xe8] sm:$0xff] %vm1392, %v1381
    %1423 = vst.msk [vmem:[#allocation5 + $0xf0] sm:$0xff] %vm1392, %v1386
    %1424 = vst.msk [vmem:[#allocation5 + $0xf8] sm:$0xff] %vm1392, %v1389
    // Predicated region
    $region26: #{nonlinear_bin.1} parent=1 // pred_check
      _
    $region27: #{nonlinear_bin.1} parent=1 // pred_check_branch
      %1426 = sbr.rel (0) target = $region29
    $region28: #{nonlinear_bin.1} parent=1 // pred_region
      %s1428 = ssub.s32 4096, 256
      %1429 = vsyncadd [#allocation4], %s1428
      %s1430 = sshll.u32 [#allocation5], 4
      %s1431 = int_to_ptr.vmem [resolvable:$true] %s1430
      %1436 = dma.vmem_to_hbm [thread:$0]  %s1431, 256, %s5, [#allocation4], 128, 128, 8
    $region29: #{nonlinear_bin.1} parent=1 // pred_fallthru
      _
    // Predicated region
    $region30: #{nonlinear_bin.1} parent=1 // pred_check
      _
    $region31: #{nonlinear_bin.1} parent=1 // pred_check_branch
      %1438 = sbr.rel (0) target = $region33
    $region32: #{nonlinear_bin.1} parent=1 // pred_region
      %1439 = dma.done [#allocation4], 4096
    $region33: #{nonlinear_bin.1} parent=1 // pred_fallthru
      _
    %1440 = vsyncpa [#allocation3], 1
    %1441 = vsyncpa [#allocation4], 1

</llo_original>
